<compile_context>
chip_gen: v7x
topology: tpu7x:2x2x1
jax: 0.10.0
libtpu: 0.0.40
codegen_flags: <defaults>
</compile_context>

<pallas_src>
import functools

import jax
import jax.numpy as jnp
from jax import lax
from jax.experimental import pallas as pl
from jax.experimental.pallas import tpu as pltpu

LANE = 128     # lane quantum (last dim)
SUBLANE = 8    # f32 sublane quantum (second-to-last dim)


def _round_up(n, m):
    return ((n + m - 1) // m) * m


def fc_kernel(x_ref, w_ref, b_ref, o_ref):
    # x_ref: [Bp, D]  bf16   (sublane-padded batch)
    # w_ref: [Cp, D]  bf16   (native PyTorch [out, in] layout, lane-padded classes)
    # b_ref: [1, Cp]  f32
    # o_ref: [Bp, Cp] f32
    acc = lax.dot_general(
        x_ref[...], w_ref[...],
        dimension_numbers=(((1,), (1,)), ((), ())),   # x @ W^T on the MXU
        preferred_element_type=jnp.float32,           # f32 accumulation
    )
    o_ref[...] = acc + b_ref[...]                     # f32 epilogue (v5e-safe)


def prepare_fc_params(fc_weight, fc_bias):
    """One-time packing of nn.Linear params into the kernel-friendly layout.

    fc_weight: [num_classes, dim_in] (PyTorch convention)
    fc_bias:   [num_classes]
    returns (w_packed [Cp, D] bf16, b_packed [1, Cp] f32, num_classes)
    """
    C, D = fc_weight.shape
    Cp = _round_up(C, LANE)
    w_packed = jnp.zeros((Cp, D), jnp.bfloat16).at[:C, :].set(
        fc_weight.astype(jnp.bfloat16))
    b_packed = jnp.zeros((1, Cp), jnp.float32).at[0, :C].set(
        fc_bias.astype(jnp.float32))
    return w_packed, b_packed, C


@functools.partial(jax.jit, static_argnames=("num_classes",))
def resnet18_later_part_forward(x, w_packed, b_packed, *, num_classes):
    """Equivalent of:  out = torch.flatten(x, 1); out = self.fc(out)

    x:        [B, C, H, W] float32 (NCHW), e.g. [B, 512, 1, 1] post-avgpool.
    w_packed: [Cp, D] bf16 from prepare_fc_params
    b_packed: [1, Cp] f32  from prepare_fc_params
    returns:  [B, num_classes] float32
    """
    B = x.shape[0]
    x_flat = x.reshape(B, -1)                         # torch.flatten(x, 1)
    D = x_flat.shape[1]
    Cp, Dw = w_packed.shape
    assert Dw == D, (w_packed.shape, D)

    # Pad batch to the sublane quantum and cast the MXU LHS to bf16.
    Bp = _round_up(B, SUBLANE)
    x_pad = jnp.zeros((Bp, D), jnp.bfloat16).at[:B, :].set(
        x_flat.astype(jnp.bfloat16))

    out_pad = pl.pallas_call(
        fc_kernel,
        out_shape=jax.ShapeDtypeStruct((Bp, Cp), jnp.float32),
        # Single kernel invocation: whole-array VMEM blocks, no grid/pipeline.
        in_specs=[
            pl.BlockSpec(memory_space=pltpu.MemorySpace.VMEM),
            pl.BlockSpec(memory_space=pltpu.MemorySpace.VMEM),
            pl.BlockSpec(memory_space=pltpu.MemorySpace.VMEM),
        ],
        out_specs=pl.BlockSpec(memory_space=pltpu.MemorySpace.VMEM),
    )(x_pad, w_packed, b_packed)

    # Slice away batch / class padding outside the kernel.
    return out_pad[:B, :num_classes]


if __name__ == "__main__":
    # model_dict['resnet18'] -> dim_in = 512, num_classes = 10
    dim_in = 512
    num_classes = 10
    B, H, W = 2, 1, 1   # post-avgpool ResNet18 feature map: [B, 512, 1, 1]

    key = jax.random.PRNGKey(0)
    kx, kw, kb = jax.random.split(key, 3)

    x = jax.random.normal(kx, (B, dim_in, H, W), dtype=jnp.float32)
    # Deterministic synthetic Linear params (PyTorch shape convention [out, in]).
    fc_weight = jax.random.normal(kw, (num_classes, dim_in), dtype=jnp.float32) * 0.02
    fc_bias = jax.random.normal(kb, (num_classes,), dtype=jnp.float32) * 0.02

    # One-time parameter packing, outside the per-step hot path.
    w_packed, b_packed, C = prepare_fc_params(fc_weight, fc_bias)

    out = resnet18_later_part_forward(x, w_packed, b_packed, num_classes=C)
    out = jax.block_until_ready(out)

    # Pure-JAX f32 reference (flatten + linear). bf16 MXU inputs => looser tol.
    ref = x.reshape(B, -1) @ fc_weight.T + fc_bias
    assert out.shape == (B, num_classes)
    assert jnp.allclose(out, ref, atol=2e-2, rtol=2e-2), float(jnp.max(jnp.abs(out - ref)))

    print("KERNEL_OK")
</pallas_src>

<mosaic_0001>
module attributes {stable_mosaic.version = 11 : i64} {
  func.func @fc_kernel(%arg0: memref<8x512xbf16, #tpu.memory_space<vmem>>, %arg1: memref<128x512xbf16, #tpu.memory_space<vmem>>, %arg2: memref<1x128xf32, #tpu.memory_space<vmem>>, %arg3: memref<8x128xf32, #tpu.memory_space<vmem>>) attributes {dimension_semantics = [], scalar_prefetch = 0 : i64, scratch_operands = 0 : i64, tpu.core_type = #tpu.core_type<tc>} {
    %c0 = arith.constant 0 : index
    %c0_0 = arith.constant 0 : index
    %0 = vector.load %arg0[%c0, %c0_0] : memref<8x512xbf16, #tpu.memory_space<vmem>>, vector<8x512xbf16>
    %c0_1 = arith.constant 0 : index
    %c0_2 = arith.constant 0 : index
    %1 = vector.load %arg1[%c0_1, %c0_2] : memref<128x512xbf16, #tpu.memory_space<vmem>>, vector<128x512xbf16>
    %cst = arith.constant dense<0.000000e+00> : vector<8x128xf32>
    %2 = tpu.matmul %0, %1, %cst {dimension_numbers = #tpu.dot_dimension_numbers<[1], [1], [0], [0], [0, 0, 1, 0], [], []>} : vector<8x512xbf16>, vector<128x512xbf16>, vector<8x128xf32> -> vector<8x128xf32>
    %c0_3 = arith.constant 0 : index
    %c0_4 = arith.constant 0 : index
    %3 = vector.load %arg2[%c0_3, %c0_4] : memref<1x128xf32, #tpu.memory_space<vmem>>, vector<1x128xf32>
    %4 = vector.broadcast %3 : vector<1x128xf32> to vector<8x128xf32>
    %5 = arith.addf %2, %4 : vector<8x128xf32>
    %c0_5 = arith.constant 0 : index
    %c0_6 = arith.constant 0 : index
    %6 = vector.load %arg3[%c0_5, %c0_6] : memref<8x128xf32, #tpu.memory_space<vmem>>, vector<8x128xf32>
    tpu.vector_store %arg3[%c0_5, %c0_6], %5 {strides = array<i32>} : memref<8x128xf32, #tpu.memory_space<vmem>>, vector<8x128xf32>,
    return
  }
}

</mosaic_0001>

<llo_original>
// kernel: resnet18_later_part_forward.1
$region0: #{resnet18_later_part_forward.1}
  #allocation0 [shape = 'u32[]', space=smem, size = 0x4, offset = 0x4, fixed_abs, tag = 'smem constant byte address 0x4 - core index']
  #allocation1 [shape = 'u32[144,128]{1,0:T(1,128)}', space=vmem, size = 0x12000, scoped, tag = 'internal scratch']
  %s0 = inlined_call_operand.vmem [shape: bf16[8,512], index: 0, kind: input, shape index: {}]
  %s1 = inlined_call_operand.hbm [shape: bf16[128,512], index: 1, kind: input, shape index: {}]
  %s2 = inlined_call_operand.vmem [shape: f32[1,128], index: 2, kind: input, shape index: {}]
  %s3 = inlined_call_operand.vmem [shape: f32[8,128], index: 3, kind: output, shape index: {}]
  %s4 = sld [smem:[#allocation0]]
  $region26: #{resnet18_later_part_forward.1} parent=0
    _
  %s6 = ssub.s32 1, %s4
  %s7 = scalar_select 0, %s6, %s4
  $region1: #{resnet18_later_part_forward.1} parent=0
    #allocation2 [shape = 'u8[131072]{0}', space=vmem, size = 0x20000, scoped, tag = 'input window, operand 1, single buffered']
    #allocation3 [shape = 's32[1]{0}', space=sflag, size = 0x4, scoped, tag = 'scoped memory for resnet18_later_part_forward.1']
    %8 = vsyncpa [#allocation3], 0
    // Predicated region
    $region2: #{resnet18_later_part_forward.1} parent=1 // pred_check
      _
    $region3: #{resnet18_later_part_forward.1} parent=1 // pred_check_branch
      %10 = sbr.rel (0) target = $region5
    $region4: #{resnet18_later_part_forward.1} parent=1 // pred_region
      _
    $region5: #{resnet18_later_part_forward.1} parent=1 // pred_fallthru
      _
    // Predicated region
    $region6: #{resnet18_later_part_forward.1} parent=1 // pred_check
      _
    $region7: #{resnet18_later_part_forward.1} parent=1 // pred_check_branch
      %12 = sbr.rel (0) target = $region9
    $region8: #{resnet18_later_part_forward.1} parent=1 // pred_region
      %s14 = ssub.s32 4096, 4096
      %15 = vsyncadd [#allocation3], %s14
      %s16 = sshll.u32 [#allocation2], 4
      %s17 = int_to_ptr.vmem [resolvable:$true] %s16
      %22 = dma.hbm_to_vmem [thread:$0]  %s1, 4096, %s17, [#allocation3], 256, 256, 16
    $region9: #{resnet18_later_part_forward.1} parent=1 // pred_fallthru
      _
    // Predicated region
    $region10: #{resnet18_later_part_forward.1} parent=1 // pred_check
      _
    $region11: #{resnet18_later_part_forward.1} parent=1 // pred_check_branch
      %24 = sbr.rel (0) target = $region13
    $region12: #{resnet18_later_part_forward.1} parent=1 // pred_region
      _
    $region13: #{resnet18_later_part_forward.1} parent=1 // pred_fallthru
      _
    // Predicated region
    $region14: #{resnet18_later_part_forward.1} parent=1 // pred_check
      _
    $region15: #{resnet18_later_part_forward.1} parent=1 // pred_check_branch
      %26 = sbr.rel (0) target = $region17
    $region16: #{resnet18_later_part_forward.1} parent=1 // pred_region
      %27 = dma.done [#allocation3], 4096
    $region17: #{resnet18_later_part_forward.1} parent=1 // pred_fallthru
      _
    %v29 = vld [vmem:[%s0] sm:$0xff]
    %v30 = vld [vmem:[%s0 + $0x8] sm:$0xff]
    %v31 = vld [vmem:[#allocation2] sm:$0xff]
    %v32 = vld [vmem:[#allocation2 + $0x8] sm:$0xff]
    %v33 = vld [vmem:[#allocation2 + $0x10] sm:$0xff]
    %v34 = vld [vmem:[#allocation2 + $0x18] sm:$0xff]
    %v35 = vld [vmem:[#allocation2 + $0x20] sm:$0xff]
    %v36 = vld [vmem:[#allocation2 + $0x28] sm:$0xff]
    %v37 = vld [vmem:[#allocation2 + $0x30] sm:$0xff]
    %v38 = vld [vmem:[#allocation2 + $0x38] sm:$0xff]
    %v39 = vld [vmem:[#allocation2 + $0x40] sm:$0xff]
    %v40 = vld [vmem:[#allocation2 + $0x48] sm:$0xff]
    %v41 = vld [vmem:[#allocation2 + $0x50] sm:$0xff]
    %v42 = vld [vmem:[#allocation2 + $0x58] sm:$0xff]
    %v43 = vld [vmem:[#allocation2 + $0x60] sm:$0xff]
    %v44 = vld [vmem:[#allocation2 + $0x68] sm:$0xff]
    %v45 = vld [vmem:[#allocation2 + $0x70] sm:$0xff]
    %v46 = vld [vmem:[#allocation2 + $0x78] sm:$0xff]
    %v47 = vld [vmem:[#allocation2 + $0x80] sm:$0xff]
    %v48 = vld [vmem:[#allocation2 + $0x88] sm:$0xff]
    %v49 = vld [vmem:[#allocation2 + $0x90] sm:$0xff]
    %v50 = vld [vmem:[#allocation2 + $0x98] sm:$0xff]
    %v51 = vld [vmem:[#allocation2 + $0xa0] sm:$0xff]
    %v52 = vld [vmem:[#allocation2 + $0xa8] sm:$0xff]
    %v53 = vld [vmem:[#allocation2 + $0xb0] sm:$0xff]
    %v54 = vld [vmem:[#allocation2 + $0xb8] sm:$0xff]
    %v55 = vld [vmem:[#allocation2 + $0xc0] sm:$0xff]
    %v56 = vld [vmem:[#allocation2 + $0xc8] sm:$0xff]
    %v57 = vld [vmem:[#allocation2 + $0xd0] sm:$0xff]
    %v58 = vld [vmem:[#allocation2 + $0xd8] sm:$0xff]
    %v59 = vld [vmem:[#allocation2 + $0xe0] sm:$0xff]
    %v60 = vld [vmem:[#allocation2 + $0xe8] sm:$0xff]
    %v61 = vld [vmem:[#allocation2 + $0xf0] sm:$0xff]
    %v62 = vld [vmem:[#allocation2 + $0xf8] sm:$0xff]
    %v63 = vld [vmem:[%s2] sm:$0x1]
    %v65 = vlaneseq
    %v66 = vshrl.u32 %v65, 7
    %v67 = vsub.s32 0, %v66
    %v68 = vrot.slane %v63, %v67
    %v72 = vunpack.c.l.b16 %v29
    %v73 = vunpack.c.h.b16 %v29
    %v74 = vunpack.c.l.b16 %v30
    %v75 = vunpack.c.h.b16 %v30
    %v76 = vpack.c.b16 %v72, %v72
    %v77 = vpack.c.b16 %v73, %v73
    %v78 = vpack.c.b16 %v74, %v74
    %v79 = vpack.c.b16 %v75, %v75
    %v116 = vunpack.c.l.b16 %v31
    %v117 = vunpack.c.h.b16 %v31
    %v118 = vunpack.c.l.b16 %v32
    %v119 = vunpack.c.h.b16 %v32
    %v120 = vunpack.c.l.b16 %v33
    %v121 = vunpack.c.h.b16 %v33
    %v122 = vunpack.c.l.b16 %v34
    %v123 = vunpack.c.h.b16 %v34
    %v124 = vunpack.c.l.b16 %v35
    %v125 = vunpack.c.h.b16 %v35
    %v126 = vunpack.c.l.b16 %v36
    %v127 = vunpack.c.h.b16 %v36
    %v128 = vunpack.c.l.b16 %v37
    %v129 = vunpack.c.h.b16 %v37
    %v130 = vunpack.c.l.b16 %v38
    %v131 = vunpack.c.h.b16 %v38
    %v132 = vunpack.c.l.b16 %v39
    %v133 = vunpack.c.h.b16 %v39
    %v134 = vunpack.c.l.b16 %v40
    %v135 = vunpack.c.h.b16 %v40
    %v136 = vunpack.c.l.b16 %v41
    %v137 = vunpack.c.h.b16 %v41
    %v138 = vunpack.c.l.b16 %v42
    %v139 = vunpack.c.h.b16 %v42
    %v140 = vunpack.c.l.b16 %v43
    %v141 = vunpack.c.h.b16 %v43
    %v142 = vunpack.c.l.b16 %v44
    %v143 = vunpack.c.h.b16 %v44
    %v144 = vunpack.c.l.b16 %v45
    %v145 = vunpack.c.h.b16 %v45
    %v146 = vunpack.c.l.b16 %v46
    %v147 = vunpack.c.h.b16 %v46
    %v148 = vunpack.c.l.b16 %v47
    %v149 = vunpack.c.h.b16 %v47
    %v150 = vunpack.c.l.b16 %v48
    %v151 = vunpack.c.h.b16 %v48
    %v152 = vunpack.c.l.b16 %v49
    %v153 = vunpack.c.h.b16 %v49
    %v154 = vunpack.c.l.b16 %v50
    %v155 = vunpack.c.h.b16 %v50
    %v156 = vunpack.c.l.b16 %v51
    %v157 = vunpack.c.h.b16 %v51
    %v158 = vunpack.c.l.b16 %v52
    %v159 = vunpack.c.h.b16 %v52
    %v160 = vunpack.c.l.b16 %v53
    %v161 = vunpack.c.h.b16 %v53
    %v162 = vunpack.c.l.b16 %v54
    %v163 = vunpack.c.h.b16 %v54
    %v164 = vunpack.c.l.b16 %v55
    %v165 = vunpack.c.h.b16 %v55
    %v166 = vunpack.c.l.b16 %v56
    %v167 = vunpack.c.h.b16 %v56
    %v168 = vunpack.c.l.b16 %v57
    %v169 = vunpack.c.h.b16 %v57
    %v170 = vunpack.c.l.b16 %v58
    %v171 = vunpack.c.h.b16 %v58
    %v172 = vunpack.c.l.b16 %v59
    %v173 = vunpack.c.h.b16 %v59
    %v174 = vunpack.c.l.b16 %v60
    %v175 = vunpack.c.h.b16 %v60
    %v176 = vunpack.c.l.b16 %v61
    %v177 = vunpack.c.h.b16 %v61
    %v178 = vunpack.c.l.b16 %v62
    %v179 = vunpack.c.h.b16 %v62
    %v180 = vpack.c.b16 %v120, %v116
    %v181 = vpack.c.b16 %v121, %v117
    %v182 = vpack.c.b16 %v122, %v118
    %v183 = vpack.c.b16 %v123, %v119
    %v184 = vpack.c.b16 %v128, %v124
    %v185 = vpack.c.b16 %v129, %v125
    %v186 = vpack.c.b16 %v130, %v126
    %v187 = vpack.c.b16 %v131, %v127
    %v188 = vpack.c.b16 %v136, %v132
    %v189 = vpack.c.b16 %v137, %v133
    %v190 = vpack.c.b16 %v138, %v134
    %v191 = vpack.c.b16 %v139, %v135
    %v192 = vpack.c.b16 %v144, %v140
    %v193 = vpack.c.b16 %v145, %v141
    %v194 = vpack.c.b16 %v146, %v142
    %v195 = vpack.c.b16 %v147, %v143
    %v196 = vpack.c.b16 %v152, %v148
    %v197 = vpack.c.b16 %v153, %v149
    %v198 = vpack.c.b16 %v154, %v150
    %v199 = vpack.c.b16 %v155, %v151
    %v200 = vpack.c.b16 %v160, %v156
    %v201 = vpack.c.b16 %v161, %v157
    %v202 = vpack.c.b16 %v162, %v158
    %v203 = vpack.c.b16 %v163, %v159
    %v204 = vpack.c.b16 %v168, %v164
    %v205 = vpack.c.b16 %v169, %v165
    %v206 = vpack.c.b16 %v170, %v166
    %v207 = vpack.c.b16 %v171, %v167
    %v208 = vpack.c.b16 %v176, %v172
    %v209 = vpack.c.b16 %v177, %v173
    %v210 = vpack.c.b16 %v178, %v174
    %v211 = vpack.c.b16 %v179, %v175
    %244 = vmatprep.subr.bf16.mxu0 %v181
    %245 = vmatpush1.bf16.xpose.msra.mxu0 %v180
    %246 = vmatprep.subr.bf16.mxu0 %v185
    %247 = vmatpush1.bf16.xpose.msra.mxu0 %v184
    %248 = vmatprep.subr.bf16.mxu0 %v189
    %249 = vmatpush1.bf16.xpose.msra.mxu0 %v188
    %250 = vmatprep.subr.bf16.mxu0 %v193
    %251 = vmatpush1.bf16.xpose.msra.mxu0 %v192
    %252 = vmatprep.subr.bf16.mxu0 %v197
    %253 = vmatpush1.bf16.xpose.msra.mxu0 %v196
    %254 = vmatprep.subr.bf16.mxu0 %v201
    %255 = vmatpush1.bf16.xpose.msra.mxu0 %v200
    %256 = vmatprep.subr.bf16.mxu0 %v205
    %257 = vmatpush1.bf16.xpose.msra.mxu0 %v204
    %258 = vmatprep.subr.bf16.mxu0 %v209
    %259 = vmatpush1.bf16.xpose.msra.mxu0 %v208
    %260 = vmatprep.subr.bf16.mxu0 0
    %261 = vmatpush1.bf16.xpose.msra.mxu0 0
    %262 = vmatprep.subr.bf16.mxu0 0
    %263 = vmatpush1.bf16.xpose.msra.mxu0 0
    %264 = vmatprep.subr.bf16.mxu0 0
    %265 = vmatpush1.bf16.xpose.msra.mxu0 0
    %266 = vmatprep.subr.bf16.mxu0 0
    %267 = vmatpush1.bf16.xpose.msra.mxu0 0
    %268 = vmatprep.subr.bf16.mxu0 0
    %269 = vmatpush1.bf16.xpose.msra.mxu0 0
    %270 = vmatprep.subr.bf16.mxu0 0
    %271 = vmatpush1.bf16.xpose.msra.mxu0 0
    %272 = vmatprep.subr.bf16.mxu0 0
    %273 = vmatpush1.bf16.xpose.msra.mxu0 0
    %274 = vmatprep.subr.bf16.mxu0 0
    %275 = vmatpush1.bf16.xpose.msra.mxu0 0
    %276 = vmatprep.mubr.bf16.mxu0 %v77
    %277 = vmatmul.mubr.bf16.gmra.mrb[0].mxu0 %v76
    %v278 = vpop.f32.mrb[0].mxu0
    %v279 = vadd.f32 %v68, %v278
    %v280 = vpop.f32.mrb[0].mxu0
    %v281 = vpop.f32.mrb[0].mxu0
    %v282 = vpop.f32.mrb[0].mxu0
    %283 = vdwg.mxu0
    %284 = vmatprep.subr.bf16.mxu0 %v183
    %285 = vmatpush1.bf16.xpose.msra.mxu0 %v182
    %286 = vmatprep.subr.bf16.mxu0 %v187
    %287 = vmatpush1.bf16.xpose.msra.mxu0 %v186
    %288 = vmatprep.subr.bf16.mxu0 %v191
    %289 = vmatpush1.bf16.xpose.msra.mxu0 %v190
    %290 = vmatprep.subr.bf16.mxu0 %v195
    %291 = vmatpush1.bf16.xpose.msra.mxu0 %v194
    %292 = vmatprep.subr.bf16.mxu0 %v199
    %293 = vmatpush1.bf16.xpose.msra.mxu0 %v198
    %294 = vmatprep.subr.bf16.mxu0 %v203
    %295 = vmatpush1.bf16.xpose.msra.mxu0 %v202
    %296 = vmatprep.subr.bf16.mxu0 %v207
    %297 = vmatpush1.bf16.xpose.msra.mxu0 %v206
    %298 = vmatprep.subr.bf16.mxu0 %v211
    %299 = vmatpush1.bf16.xpose.msra.mxu0 %v210
    %300 = vmatprep.subr.bf16.mxu0 0
    %301 = vmatpush1.bf16.xpose.msra.mxu0 0
    %302 = vmatprep.subr.bf16.mxu0 0
    %303 = vmatpush1.bf16.xpose.msra.mxu0 0
    %304 = vmatprep.subr.bf16.mxu0 0
    %305 = vmatpush1.bf16.xpose.msra.mxu0 0
    %306 = vmatprep.subr.bf16.mxu0 0
    %307 = vmatpush1.bf16.xpose.msra.mxu0 0
    %308 = vmatprep.subr.bf16.mxu0 0
    %309 = vmatpush1.bf16.xpose.msra.mxu0 0
    %310 = vmatprep.subr.bf16.mxu0 0
    %311 = vmatpush1.bf16.xpose.msra.mxu0 0
    %312 = vmatprep.subr.bf16.mxu0 0
    %313 = vmatpush1.bf16.xpose.msra.mxu0 0
    %314 = vmatprep.subr.bf16.mxu0 0
    %315 = vmatpush1.bf16.xpose.msra.mxu0 0
    %316 = vmatprep.mubr.bf16.mxu0 %v79
    %317 = vmatmul.mubr.bf16.gmra.mrb[0].mxu0 %v78
    %v318 = vpop.f32.mrb[0].mxu0
    %v319 = vadd.f32 %v279, %v318
    %v320 = vpop.f32.mrb[0].mxu0
    %v321 = vpop.f32.mrb[0].mxu0
    %v322 = vpop.f32.mrb[0].mxu0
    %323 = vdwg.mxu0
    %324 = vst [vmem:[%s3] sm:$0xff] %v319
    // Predicated region
    $region18: #{resnet18_later_part_forward.1} parent=1 // pred_check
      _
    $region19: #{resnet18_later_part_forward.1} parent=1 // pred_check_branch
      %326 = sbr.rel (0) target = $region21
    $region20: #{resnet18_later_part_forward.1} parent=1 // pred_region
      _
    $region21: #{resnet18_later_part_forward.1} parent=1 // pred_fallthru
      _
    // Predicated region
    $region22: #{resnet18_later_part_forward.1} parent=1 // pred_check
      _
    $region23: #{resnet18_later_part_forward.1} parent=1 // pred_check_branch
      %328 = sbr.rel (0) target = $region25
    $region24: #{resnet18_later_part_forward.1} parent=1 // pred_region
      _
    $region25: #{resnet18_later_part_forward.1} parent=1 // pred_fallthru
      _
    %329 = vsyncpa [#allocation3], 1

</llo_original>
